<compile_context>
chip_gen: v5e
topology: v5e:2x2
jax: 0.10.0
libtpu: 0.0.40
codegen_flags: <defaults>
</compile_context>

<pallas_src>
import functools
import math

import jax
import jax.numpy as jnp
from jax.experimental import pallas as pl
from jax.experimental.pallas import tpu as pltpu

_LANES = 128


def _mul_reduce(x_ref, w_ref, tj):
    """f32 row-sums of x_block * w_block over this block's J slice.

    Two-stage reduce: per-128-lane chunk multiply-accumulate (pure VPU vreg adds),
    then exactly one cross-lane (XLU) reduce per output row."""
    if tj >= _LANES and tj % _LANES == 0:
        acc = None
        for c in range(tj // _LANES):
            sl = slice(c * _LANES, (c + 1) * _LANES)
            part = (x_ref[:, :, sl].astype(jnp.float32)
                    * w_ref[:, sl].astype(jnp.float32)[None, :, :])
            acc = part if acc is None else acc + part
        return jnp.sum(acc, axis=-1)
    # Small / non-128-aligned J: single-stage (cheap, hides under the DMA).
    x = x_ref[...].astype(jnp.float32)
    w = w_ref[...].astype(jnp.float32)
    return jnp.sum(x * w[None, :, :], axis=-1)


def _ewpool_kernel(x_ref, w_ref, b_ref, o_ref, acc_ref, *, tj):
    # x_ref: (TB, TI, TJ)  w_ref: (TI, TJ)  b_ref: (1, TI)
    # o_ref: (TB, TI)      acc_ref: (TB, TI) f32 scratch, resident across the k sweep
    k = pl.program_id(2)

    @pl.when(k == 0)
    def _():
        acc_ref[...] = jnp.zeros_like(acc_ref)

    acc_ref[...] += _mul_reduce(x_ref, w_ref, tj)

    @pl.when(k == pl.num_programs(2) - 1)
    def _():
        o_ref[...] = (acc_ref[...] + b_ref[...].astype(jnp.float32)).astype(o_ref.dtype)


def _ewpool_kernel_nobias(x_ref, w_ref, o_ref, acc_ref, *, tj):
    k = pl.program_id(2)

    @pl.when(k == 0)
    def _():
        acc_ref[...] = jnp.zeros_like(acc_ref)

    acc_ref[...] += _mul_reduce(x_ref, w_ref, tj)

    @pl.when(k == pl.num_programs(2) - 1)
    def _():
        o_ref[...] = acc_ref[...].astype(o_ref.dtype)


def _vmem_budgets():
    """(single-copy x-block budget, vmem_limit_bytes), generation-aware."""
    try:
        cap = int(pltpu.get_tpu_info().vmem_capacity_bytes)
    except Exception:
        cap = 64 * 1024 * 1024  # conservative (v7x-sized) if the query is unavailable
    if cap >= 96 * 1024 * 1024:                       # v5e / v6e: 128 MiB physical VMEM
        return 12 * 1024 * 1024, 96 * 1024 * 1024
    return 4 * 1024 * 1024, 48 * 1024 * 1024          # v7x: 64 MiB per TensorCore


def _pick_tiles(B, I, J, block_budget):
    """Choose (TB, TI, TJ) under a single-copy x-block budget (in f32 bytes):
       - TJ: whole J, or a 128-multiple divisor of J (partial J blocks would feed
         unspecified edge padding into the sum, so only exact divisors are used);
       - TI: full I when small, else a multiple of 128 (lane-dense output stores,
         (8,128) BlockSpec rule);
       - TB: full B or a multiple of 8, chosen LAST and only rounded DOWN, so the
         budget is never exceeded (TI/TJ shrink first instead of bumping TB)."""
    F32 = 4  # budget in f32 bytes: covers the in-kernel upcast/product intermediates

    tj_cands = [J]
    if J > 2048:
        # Prefer whole J (weight stays resident across the batch sweep); fall back to
        # 128-multiple divisors so the reduction can be tiled along an "arbitrary" axis.
        tj_cands = [J] + [d for d in (2048, 1024, 512, 256, 128) if J % d == 0]
    ti_cands = [I] if I <= 512 else [512, 256, 128]
    tb_min = B if B < 8 else 8

    tb = ti = tj = None
    for tj_c in tj_cands:
        for ti_c in ti_cands:
            tb_c = block_budget // (ti_c * tj_c * F32)
            if tb_c >= tb_min:
                tj, ti, tb = tj_c, ti_c, min(tb_c, B)
                break
        if tb is not None:
            break
    if tb is None:
        # Pathological shapes only (e.g. huge J with no 128-multiple divisor): take the
        # smallest candidates; may exceed the block budget.
        # TODO(synk): masked J-tiling for huge output_dim not divisible by 128.
        tj, ti, tb = min(tj_cands), min(ti_cands), tb_min

    if tb < B:
        tb = max(8, (tb // 8) * 8)       # round DOWN only; never bump past the budget

    # --- grid-shape post-pass ---------------------------------------------------
    def _steps():
        return pl.cdiv(I, ti), pl.cdiv(B, tb), pl.cdiv(J, tj)

    n_i, n_b, n_k = _steps()
    # A few grid steps give the software pipeline prefetch/writeback overlap and give
    # v7x's two TensorCores something to shard on the parallel axes.
    while n_i * n_b * n_k < 4 and tb >= 16:
        tb = max(8, ((tb // 2) // 8) * 8)
        n_i, n_b, n_k = _steps()
    # Batch too small to split further: split I instead so a parallel axis has >=2 steps.
    if n_i == 1 and n_b == 1 and I >= 256:
        ti = max(128, ((I // 2) // 128) * 128)

    return int(tb), int(ti), int(tj)


def elementwise_pooling(x, weight, bias=None):
    """x: (B, I, J), weight: (I, J), bias: (I,) or None -> (B, I)
       out[b, i] = sum_j x[b, i, j] * weight[i, j] (+ bias[i])"""
    B, I, J = x.shape
    assert weight.shape == (I, J)

    block_budget, vmem_limit = _vmem_budgets()
    tb, ti, tj = _pick_tiles(B, I, J, block_budget)

    # I outer, batch middle, J (reduction) innermost ("arbitrary"): the output /
    # accumulator tile is revisited across the k sweep, and with TJ == J the weight /
    # bias block indices are constant across the inner batch sweep, so their tiles
    # stay resident in VMEM (no re-DMA).  If a bundle dump ever shows weight being
    # re-DMA'd per batch step, flip the batch axis to "arbitrary" (cheap insurance).
    grid = (pl.cdiv(I, ti), pl.cdiv(B, tb), pl.cdiv(J, tj))

    x_spec = pl.BlockSpec((tb, ti, tj), lambda i, b, k: (b, i, k))
    w_spec = pl.BlockSpec((ti, tj), lambda i, b, k: (i, k))
    o_spec = pl.BlockSpec((tb, ti), lambda i, b, k: (b, i))

    compiler_params = pltpu.CompilerParams(
        dimension_semantics=("parallel", "parallel", "arbitrary"),
        vmem_limit_bytes=vmem_limit,
    )
    out_shape = jax.ShapeDtypeStruct((B, I), x.dtype)
    scratch = [pltpu.VMEM((tb, ti), jnp.float32)]

    bias_bytes = 0 if bias is None else int(bias.size) * bias.dtype.itemsize
    cost = pl.CostEstimate(
        flops=2 * B * I * J,
        transcendentals=0,
        bytes_accessed=int(x.size) * x.dtype.itemsize
        + int(weight.size) * weight.dtype.itemsize
        + bias_bytes
        + B * I * x.dtype.itemsize,
    )

    if bias is not None:
        assert bias.shape == (I,)
        b_spec = pl.BlockSpec((1, ti), lambda i, b, k: (0, i))
        return pl.pallas_call(
            functools.partial(_ewpool_kernel, tj=tj),
            out_shape=out_shape,
            grid=grid,
            in_specs=[x_spec, w_spec, b_spec],
            out_specs=o_spec,
            scratch_shapes=scratch,
            compiler_params=compiler_params,
            cost_estimate=cost,
        )(x, weight, bias.reshape(1, I))
    return pl.pallas_call(
        functools.partial(_ewpool_kernel_nobias, tj=tj),
        out_shape=out_shape,
        grid=grid,
        in_specs=[x_spec, w_spec],
        out_specs=o_spec,
        scratch_shapes=scratch,
        compiler_params=compiler_params,
        cost_estimate=cost,
    )(x, weight)


def init_params(key, input_dim, output_dim, bias=True):
    """Deterministic init matching the PyTorch module's uniform(-stdv, stdv)."""
    stdv = 1.0 / math.sqrt(output_dim)
    kw, kb = jax.random.split(key)
    weight = jax.random.uniform(
        kw, (input_dim, output_dim), dtype=jnp.float32, minval=-stdv, maxval=stdv
    )
    b = None
    if bias:
        b = jax.random.uniform(
            kb, (input_dim,), dtype=jnp.float32, minval=-stdv, maxval=stdv
        )
    return weight, b


if __name__ == "__main__":
    key = jax.random.PRNGKey(0)
    k_x, k_p, k_x2, k_p2, k_x3, k_p3 = jax.random.split(key, 6)

    # 1) Small shapes matching the module: (batch, input_dim, output_dim).
    batch, input_dim, output_dim = 2, 8, 32
    x = jax.random.normal(k_x, (batch, input_dim, output_dim), dtype=jnp.float32)
    weight, bias = init_params(k_p, input_dim, output_dim, bias=True)
    out = jax.block_until_ready(elementwise_pooling(x, weight, bias))
    ref = jnp.sum(x * weight[None, :, :], axis=2) + bias[None, :]
    assert out.shape == (batch, input_dim)
    assert jnp.allclose(out, ref, atol=1e-5, rtol=1e-5)

    # 2) Exercises the (I, B)-tiled grid and the bias=None path.
    B2, I2, J2 = 16, 1024, 64
    x2 = jax.random.normal(k_x2, (B2, I2, J2), dtype=jnp.float32)
    w2, _ = init_params(k_p2, I2, J2, bias=False)
    out2 = jax.block_until_ready(elementwise_pooling(x2, w2, None))
    ref2 = jnp.sum(x2 * w2[None, :, :], axis=2)
    assert out2.shape == (B2, I2)
    assert jnp.allclose(out2, ref2, atol=1e-4, rtol=1e-4)

    # 3) Exercises the J-tiled ("arbitrary") reduction axis + the f32 accumulator.
    B3, I3, J3 = 8, 256, 4096
    x3 = jax.random.normal(k_x3, (B3, I3, J3), dtype=jnp.float32)
    w3, b3 = init_params(k_p3, I3, J3, bias=True)
    out3 = jax.block_until_ready(elementwise_pooling(x3, w3, b3))
    ref3 = jnp.sum(x3 * w3[None, :, :], axis=2) + b3[None, :]
    assert out3.shape == (B3, I3)
    assert jnp.allclose(out3, ref3, atol=1e-3, rtol=1e-3)

    print("KERNEL_OK")
</pallas_src>

<mosaic_0001>
module attributes {stable_mosaic.version = 11 : i64} {
  func.func @_ewpool_kernel(%arg0: i32, %arg1: i32, %arg2: i32, %arg3: memref<2x8x32xf32, #tpu.memory_space<vmem>>, %arg4: memref<8x32xf32, #tpu.memory_space<vmem>>, %arg5: memref<1x8xf32, #tpu.memory_space<vmem>>, %arg6: memref<2x8xf32, #tpu.memory_space<vmem>>, %arg7: memref<2x8xf32, #tpu.memory_space<vmem>>) attributes {dimension_semantics = [#tpu.dimension_semantics<parallel>, #tpu.dimension_semantics<parallel>, #tpu.dimension_semantics<arbitrary>], iteration_bounds = array<i64: 1, 1, 1>, scalar_prefetch = 0 : i64, scratch_operands = 1 : i64, tpu.core_type = #tpu.core_type<tc>, window_params = [{transform_indices = @transform_0, window_bounds = array<i64: 2, 8, 32>}, {transform_indices = @transform_1, window_bounds = array<i64: 8, 32>}, {transform_indices = @transform_2, window_bounds = array<i64: 1, 8>}, {transform_indices = @transform_3, window_bounds = array<i64: 2, 8>}]} {
    %c0_i32 = arith.constant 0 : i32
    %0 = arith.cmpi eq, %arg2, %c0_i32 : i32
    %1 = arith.extui %0 : i1 to i32
    %c0_i32_0 = arith.constant 0 : i32
    %2 = arith.cmpi ne, %1, %c0_i32_0 : i32
    scf.if %2 {
      %cst_11 = arith.constant 0.000000e+00 : f32
      %15 = vector.broadcast %cst_11 : f32 to vector<2x8xf32>
      %c0_12 = arith.constant 0 : index
      %c0_13 = arith.constant 0 : index
      %16 = vector.load %arg7[%c0_12, %c0_13] : memref<2x8xf32, #tpu.memory_space<vmem>>, vector<2x8xf32>
      tpu.vector_store %arg7[%c0_12, %c0_13], %15 {strides = array<i32>} : memref<2x8xf32, #tpu.memory_space<vmem>>, vector<2x8xf32>,
    } else {
    }
    %c0 = arith.constant 0 : index
    %c0_1 = arith.constant 0 : index
    %3 = vector.load %arg7[%c0, %c0_1] : memref<2x8xf32, #tpu.memory_space<vmem>>, vector<2x8xf32>
    %c0_2 = arith.constant 0 : index
    %c0_3 = arith.constant 0 : index
    %c0_4 = arith.constant 0 : index
    %4 = vector.load %arg3[%c0_2, %c0_3, %c0_4] : memref<2x8x32xf32, #tpu.memory_space<vmem>>, vector<2x8x32xf32>
    %c0_5 = arith.constant 0 : index
    %c0_6 = arith.constant 0 : index
    %5 = vector.load %arg4[%c0_5, %c0_6] : memref<8x32xf32, #tpu.memory_space<vmem>>, vector<8x32xf32>
    %6 = vector.shape_cast %5 : vector<8x32xf32> to vector<1x8x32xf32>
    %7 = vector.broadcast %6 : vector<1x8x32xf32> to vector<2x8x32xf32>
    %8 = arith.mulf %4, %7 : vector<2x8x32xf32>
    %cst = arith.constant dense<0.000000e+00> : vector<2x8xf32>
    %9 = vector.multi_reduction <add>, %8, %cst [2] : vector<2x8x32xf32> to vector<2x8xf32>
    %10 = arith.addf %3, %9 : vector<2x8xf32>
    %c0_7 = arith.constant 0 : index
    %c0_8 = arith.constant 0 : index
    %11 = vector.load %arg7[%c0_7, %c0_8] : memref<2x8xf32, #tpu.memory_space<vmem>>, vector<2x8xf32>
    tpu.vector_store %arg7[%c0_7, %c0_8], %10 {strides = array<i32>} : memref<2x8xf32, #tpu.memory_space<vmem>>, vector<2x8xf32>,
    %c0_i32_9 = arith.constant 0 : i32
    %12 = arith.cmpi eq, %arg2, %c0_i32_9 : i32
    %13 = arith.extui %12 : i1 to i32
    %c0_i32_10 = arith.constant 0 : i32
    %14 = arith.cmpi ne, %13, %c0_i32_10 : i32
    scf.if %14 {
      %c0_11 = arith.constant 0 : index
      %c0_12 = arith.constant 0 : index
      %15 = vector.load %arg7[%c0_11, %c0_12] : memref<2x8xf32, #tpu.memory_space<vmem>>, vector<2x8xf32>
      %c0_13 = arith.constant 0 : index
      %c0_14 = arith.constant 0 : index
      %16 = vector.load %arg5[%c0_13, %c0_14] : memref<1x8xf32, #tpu.memory_space<vmem>>, vector<1x8xf32>
      %17 = vector.broadcast %16 : vector<1x8xf32> to vector<2x8xf32>
      %18 = arith.addf %15, %17 : vector<2x8xf32>
      %c0_15 = arith.constant 0 : index
      %c0_16 = arith.constant 0 : index
      %19 = vector.load %arg6[%c0_15, %c0_16] : memref<2x8xf32, #tpu.memory_space<vmem>>, vector<2x8xf32>
      tpu.vector_store %arg6[%c0_15, %c0_16], %18 {strides = array<i32>} : memref<2x8xf32, #tpu.memory_space<vmem>>, vector<2x8xf32>,
    } else {
    }
    return
  }
  func.func @transform_0(%arg0: i32, %arg1: i32, %arg2: i32) -> (i32, i32, i32) {
    %c0_i32 = arith.constant 0 : i32
    return %arg1, %arg0, %arg2 : i32, i32, i32
  }
  func.func @transform_1(%arg0: i32, %arg1: i32, %arg2: i32) -> (i32, i32) {
    %c0_i32 = arith.constant 0 : i32
    return %arg0, %arg2 : i32, i32
  }
  func.func @transform_2(%arg0: i32, %arg1: i32, %arg2: i32) -> (i32, i32) {
    %c0_i32 = arith.constant 0 : i32
    %c0_i32_0 = arith.constant 0 : i32
    return %c0_i32, %arg0 : i32, i32
  }
  func.func @transform_3(%arg0: i32, %arg1: i32, %arg2: i32) -> (i32, i32) {
    %c0_i32 = arith.constant 0 : i32
    return %arg1, %arg0 : i32, i32
  }
}

</mosaic_0001>

<llo_original>
// kernel: tpu_custom_call.1
$region0: #{tpu_custom_call.1}
  #allocation0 [shape = 'u32[]', space=smem, size = 0x4, offset = 0x4, fixed_abs, tag = 'smem constant byte address 0x4 - core index']
  #allocation1 [shape = 'u32[72,128]{1,0:T(1,128)}', space=vmem, size = 0x9000, scoped, tag = 'internal scratch']
  #allocation2 [shape = 'f32[2,8]{1,0:T(2,128)}', space=vmem, size = 0x400, scoped, tag = 'scratch operand']
  %s0 = inlined_call_operand.hbm [shape: f32[2,8,32], index: 0, kind: input, shape index: {}]
  %s1 = inlined_call_operand.hbm [shape: f32[8,32], index: 1, kind: input, shape index: {}]
  %s2 = inlined_call_operand.vmem [shape: f32[1,8], index: 2, kind: input, shape index: {}]
  %s3 = inlined_call_operand.hbm [shape: f32[2,8], index: 3, kind: output, shape index: {}]
  %s4 = sld [smem:[#allocation0]]
  $region38: #{tpu_custom_call.1} parent=0
    _
  %s6 = ssub.s32 1, %s4
  %s7 = scalar_select 0, %s6, %s4
  $region1: #{tpu_custom_call.1} parent=0
    #allocation3 [shape = 'u8[8192]{0}', space=vmem, size = 0x2000, scoped, tag = 'input window, operand 0, single buffered']
    #allocation4 [shape = 's32[1]{0}', space=sflag, size = 0x4, scoped, tag = 'scoped memory for tpu_custom_call.1']
    #allocation5 [shape = 's32[1]{0}', space=sflag, size = 0x4, scoped, tag = 'scoped memory for tpu_custom_call.1']
    #allocation6 [shape = 'u8[4096]{0}', space=vmem, size = 0x1000, scoped, tag = 'input window, operand 1, single buffered']
    #allocation7 [shape = 's32[1]{0}', space=sflag, size = 0x4, scoped, tag = 'scoped memory for tpu_custom_call.1']
    #allocation8 [shape = 'u8[1024]{0}', space=vmem, size = 0x400, scoped, tag = 'output window, operand 0, single buffered']
    %8 = vsyncpa [#allocation4], 0
    %9 = vsyncpa [#allocation7], 0
    %10 = vsyncpa [#allocation5], 0
    // Predicated region
    $region2: #{tpu_custom_call.1} parent=1 // pred_check
      _
    $region3: #{tpu_custom_call.1} parent=1 // pred_check_branch
      %12 = sbr.rel (0) target = $region5
    $region4: #{tpu_custom_call.1} parent=1 // pred_region
      %14 = vsyncadd [#allocation4], 0
      %s15 = sshll.u32 %s0, 4
      %s16 = int_to_ptr.hbm [resolvable:$true] %s15
      %s17 = sshll.u32 [#allocation3], 4
      %s18 = int_to_ptr.vmem [resolvable:$true] %s17
      %23 = dma.hbm_to_vmem [thread:$0]  %s16, 256, %s18, [#allocation4], 128, 128, 8
    $region5: #{tpu_custom_call.1} parent=1 // pred_fallthru
      _
    // Predicated region
    $region6: #{tpu_custom_call.1} parent=1 // pred_check
      _
    $region7: #{tpu_custom_call.1} parent=1 // pred_check_branch
      %25 = sbr.rel (0) target = $region9
    $region8: #{tpu_custom_call.1} parent=1 // pred_region
      %27 = vsyncadd [#allocation7], 0
      %s29 = sshll.u32 %s1, 4
      %s30 = int_to_ptr.hbm [resolvable:$true] %s29
      %s31 = sshll.u32 [#allocation6], 4
      %s32 = int_to_ptr.vmem [resolvable:$true] %s31
      %34 = dma.hbm_to_vmem [thread:$0]  %s30, 128, %s32, [#allocation7]
    $region9: #{tpu_custom_call.1} parent=1 // pred_fallthru
      _
    // Predicated region
    $region10: #{tpu_custom_call.1} parent=1 // pred_check
      _
    $region11: #{tpu_custom_call.1} parent=1 // pred_check_branch
      %36 = sbr.rel (0) target = $region13
    $region12: #{tpu_custom_call.1} parent=1 // pred_region
      _
    $region13: #{tpu_custom_call.1} parent=1 // pred_fallthru
      _
    // Predicated region
    $region14: #{tpu_custom_call.1} parent=1 // pred_check
      _
    $region15: #{tpu_custom_call.1} parent=1 // pred_check_branch
      %38 = sbr.rel (0) target = $region17
    $region16: #{tpu_custom_call.1} parent=1 // pred_region
      %40 = dma.done [#allocation4], 256
    $region17: #{tpu_custom_call.1} parent=1 // pred_fallthru
      _
    // Predicated region
    $region18: #{tpu_custom_call.1} parent=1 // pred_check
      _
    $region19: #{tpu_custom_call.1} parent=1 // pred_check_branch
      %42 = sbr.rel (0) target = $region21
    $region20: #{tpu_custom_call.1} parent=1 // pred_region
      %44 = dma.done [#allocation7], 128
    $region21: #{tpu_custom_call.1} parent=1 // pred_fallthru
      _
    %p45 = scmp.eq.s32.totalorder 0, 0
    // Predicated region
    $region22: #{tpu_custom_call.1} parent=1 // pred_check
      %p46 = pneg %p45
    $region23: #{tpu_custom_call.1} parent=1 // pred_check_branch
      %48 = sbr.rel (%p46) target = $region25
    $region24: #{tpu_custom_call.1} parent=1 // pred_region
      %vm49 = vcmask 58368
      %50 = vst.msk [vmem:[#allocation2] sm:$0x3] %vm49, 0.0
    $region25: #{tpu_custom_call.1} parent=1 // pred_fallthru
      _
    %v51 = vld [vmem:[#allocation2] sm:$0x3]
    %v52 = vld [vmem:[#allocation3] sm:$0xff]
    %v53 = vld [vmem:[#allocation3 + $0x8] sm:$0xff]
    %v54 = vld [vmem:[#allocation6] sm:$0xff]
    %v55 = vmul.f32 %v52, %v54
    %v56 = vmul.f32 %v53, %v54
    %vm57 = vcmask 261120
    %v58 = vsel %vm57, %v55, 0.0
    %59 = vadd.xlane.f32.xlu0 %v58
    %v60 = vpop.xlane.xlu0 %59
    %v61 = vsel %vm57, %v56, 0.0
    %62 = vadd.xlane.f32.xlu0 %v61
    %v63 = vpop.xlane.xlu0 %62
    %v66 = vlaneseq
    %v67 = vand.u32 %v66, 127
    %v68 = vperm.slane %v60, %v67
    %v69 = vperm.slane %v63, %v67
    %vm70 = vcmask 1041409
    %v71 = vsel %vm70, %v69, %v68
    %v73 = vadd.f32 %v51, %v71
    %vm74 = vcmask 58368
    %75 = vst.msk [vmem:[#allocation2] sm:$0x3] %vm74, %v73
    // Predicated region
    $region26: #{tpu_custom_call.1} parent=1 // pred_check
      %p76 = pneg %p45
    $region27: #{tpu_custom_call.1} parent=1 // pred_check_branch
      %78 = sbr.rel (%p76) target = $region29
    $region28: #{tpu_custom_call.1} parent=1 // pred_region
      %v79 = vld [vmem:[#allocation2] sm:$0x3]
      %v80 = vld [vmem:[%s2] sm:$0x1]
      %v82 = vperm.slane %v80, 0
      %v84 = vadd.f32 %v79, %v82
      %85 = vst.msk [vmem:[#allocation8] sm:$0x3] %vm74, %v84
    $region29: #{tpu_custom_call.1} parent=1 // pred_fallthru
      _
    // Predicated region
    $region30: #{tpu_custom_call.1} parent=1 // pred_check
      _
    $region31: #{tpu_custom_call.1} parent=1 // pred_check_branch
      %87 = sbr.rel (0) target = $region33
    $region32: #{tpu_custom_call.1} parent=1 // pred_region
      %89 = vsyncadd [#allocation5], 0
      %s91 = sshll.u32 [#allocation8], 4
      %s92 = int_to_ptr.vmem [resolvable:$true] %s91
      %s93 = sshll.u32 %s3, 4
      %s94 = int_to_ptr.hbm [resolvable:$true] %s93
      %96 = dma.vmem_to_hbm [thread:$0]  %s92, 32, %s94, [#allocation5]
    $region33: #{tpu_custom_call.1} parent=1 // pred_fallthru
      _
    // Predicated region
    $region34: #{tpu_custom_call.1} parent=1 // pred_check
      _
    $region35: #{tpu_custom_call.1} parent=1 // pred_check_branch
      %98 = sbr.rel (0) target = $region37
    $region36: #{tpu_custom_call.1} parent=1 // pred_region
      %100 = dma.done [#allocation5], 32
    $region37: #{tpu_custom_call.1} parent=1 // pred_fallthru
      _
    %101 = vsyncpa [#allocation4], 1
    %102 = vsyncpa [#allocation7], 1
    %103 = vsyncpa [#allocation5], 1

</llo_original>
